<compile_context>
chip_gen: v5e
topology: v5e:2x2
jax: 0.10.0
libtpu: 0.0.40
codegen_flags: <defaults>
</compile_context>

<pallas_src>
import functools
import math

import jax
import jax.numpy as jnp
from jax.experimental import pallas as pl
from jax.experimental.pallas import tpu as pltpu

NEG_SLOPE = 0.01  # torch.nn.LeakyReLU default negative_slope


def _round_up(v: int, m: int) -> int:
    return ((v + m - 1) // m) * m


@functools.lru_cache(maxsize=1)
def _vmem_limit_bytes() -> int:
    """Per-generation VMEM limit: ~96 MiB on v5e/v6e (128 MiB physical VMEM),
    ~48 MiB on v7x (64 MiB physical).  Falls back to the conservative v7x
    number if the hardware query is unavailable."""
    cap = None
    try:
        cap = getattr(pltpu.get_tpu_info(), "vmem_capacity_bytes", None)
    except Exception:
        cap = None
    if not cap:
        cap = 64 * 1024 * 1024
    return int(cap) * 3 // 4


def make_plan(n: int, num_features: int, num_classes: int, *,
              force_streaming: bool = False) -> dict:
    """Decide between the VMEM-resident path and the streaming path."""
    cpad = _round_up(max(num_classes, 1), 128)
    limit = _vmem_limit_bytes()

    if not force_streaming:
        npad_r = _round_up(max(n, 8), 8) if n <= 128 else _round_up(n, 128)
        # Conservative budget: assume inputs/outputs may be double-buffered.
        a_buf = 2 * npad_r * npad_r * 2              # bf16 A
        x_buf = 2 * npad_r * num_features * 4        # f32 x
        state = 4 * npad_r * cpad * 4                # out (x2) + 2 T scratch
        if npad_r <= 4096 and (a_buf + x_buf + state) <= int(0.7 * limit):
            return dict(path="resident", npad=npad_r, vmem_limit=limit)

    # Streaming path: A is re-streamed per order in (tm, tk) bf16 tiles.
    if n <= 2048:
        # only reached when forced (or with a tiny VMEM budget): small tiles
        npad = _round_up(max(n, 16), 256)
        tm, tk = 128, 128
    else:
        npad = _round_up(n, 2048)
        tm, tk = 2048, 1024          # big tm cuts T_prev re-reads + step count
    return dict(path="stream", npad=npad, tm=tm, tk=tk,
                tm_mlp=min(tm, 1024), vmem_limit=limit)


# ---------------------------------------------------------------------------
# Input preparation (hoisted so a static graph is padded/cast only once).
# ---------------------------------------------------------------------------
def prepare_features(x, plan):
    npad = plan["npad"]
    return jnp.zeros((npad, x.shape[1]), jnp.float32).at[:x.shape[0], :].set(x)


def prepare_adjacency(a_norm, plan):
    npad = plan["npad"]
    n = a_norm.shape[0]
    # Zero padding is inert: padded columns of A are zero, so padded rows of
    # the T state never contaminate real rows; outputs are sliced to [:n, :C].
    return jnp.zeros((npad, npad), jnp.bfloat16).at[:n, :n].set(
        a_norm.astype(jnp.bfloat16))


# ---------------------------------------------------------------------------
# Path A: fully VMEM-resident kernel (MLP + all K orders in one pallas_call).
# ---------------------------------------------------------------------------
def _make_resident_kernel(K: int):
    def kernel(coef_ref, x_ref, w1_ref, b1_ref, w2_ref, b2_ref, a_ref,
               out_ref, tp_ref, tpp_ref):
        # MLP: linear1 -> leaky_relu -> linear2   (T0)
        h = jnp.dot(x_ref[...], w1_ref[...], preferred_element_type=jnp.float32)
        h = h + b1_ref[...]
        h = jnp.where(h > 0, h, NEG_SLOPE * h)
        t0 = jnp.dot(h, w2_ref[...], preferred_element_type=jnp.float32)
        t0 = t0 + b2_ref[...]
        out_ref[...] = coef_ref[0] * t0

        if K >= 1:
            tp_ref[...] = t0                         # T_prev = T0
            prev, prevprev = tp_ref, tpp_ref         # ping-pong scratch refs
            for k in range(1, K + 1):                # K is small & static
                at = jnp.dot(a_ref[...], prev[...].astype(jnp.bfloat16),
                             preferred_element_type=jnp.float32)
                t_new = at if k == 1 else 2.0 * at - prevprev[...]
                out_ref[...] += coef_ref[k] * t_new
                prevprev[...] = t_new
                prev, prevprev = prevprev, prev
    return kernel


def _forward_resident(params, x_pad, a_pad, plan, K):
    npad = plan["npad"]
    f = x_pad.shape[1]
    hpad = params["w1t_pad"].shape[1]
    cpad = params["w2t_pad"].shape[1]
    return pl.pallas_call(
        _make_resident_kernel(K),
        out_shape=jax.ShapeDtypeStruct((npad, cpad), jnp.float32),
        grid_spec=pltpu.PrefetchScalarGridSpec(
            num_scalar_prefetch=0,
            grid=(1,),
            in_specs=[
                pl.BlockSpec(memory_space=pltpu.MemorySpace.SMEM),  # coef (K+1,)
                pl.BlockSpec((npad, f), lambda i: (0, 0)),          # x
                pl.BlockSpec((f, hpad), lambda i: (0, 0)),          # w1t
                pl.BlockSpec((1, hpad), lambda i: (0, 0)),          # b1
                pl.BlockSpec((hpad, cpad), lambda i: (0, 0)),       # w2t
                pl.BlockSpec((1, cpad), lambda i: (0, 0)),          # b2
                pl.BlockSpec((npad, npad), lambda i: (0, 0)),       # A (bf16)
            ],
            out_specs=pl.BlockSpec((npad, cpad), lambda i: (0, 0)),
            scratch_shapes=[pltpu.VMEM((npad, cpad), jnp.float32),  # T_prev
                            pltpu.VMEM((npad, cpad), jnp.float32)], # T_prevprev
        ),
        compiler_params=pltpu.CompilerParams(
            dimension_semantics=("arbitrary",),
            vmem_limit_bytes=plan["vmem_limit"],
        ),
    )(params["coef"], x_pad, params["w1t_pad"], params["b1_pad"],
      params["w2t_pad"], params["b2_pad"], a_pad)


# ---------------------------------------------------------------------------
# Path B (streaming): MLP kernel + one tiled matmul pass per Chebyshev order.
# ---------------------------------------------------------------------------
def _mlp_kernel(c0_ref, x_ref, w1_ref, b1_ref, w2_ref, b2_ref,
                t0_ref, t0b_ref, out0_ref):
    x = x_ref[...]
    h = jnp.dot(x, w1_ref[...], preferred_element_type=jnp.float32)
    h = h + b1_ref[...]
    h = jnp.where(h > 0, h, NEG_SLOPE * h)                       # LeakyReLU
    t0 = jnp.dot(h, w2_ref[...], preferred_element_type=jnp.float32)
    t0 = t0 + b2_ref[...]
    t0_ref[...] = t0
    t0b_ref[...] = t0.astype(jnp.bfloat16)                       # bf16 carry
    out0_ref[...] = c0_ref[0] * t0                               # c0 * T0


def mlp_forward(coef0, x_pad, w1t, b1, w2t, b2, *, tm, vmem_limit):
    npad, f = x_pad.shape
    hpad = w1t.shape[1]
    cpad = w2t.shape[1]
    return pl.pallas_call(
        _mlp_kernel,
        out_shape=(
            jax.ShapeDtypeStruct((npad, cpad), jnp.float32),    # T0 (f32)
            jax.ShapeDtypeStruct((npad, cpad), jnp.bfloat16),   # T0 (bf16 carry)
            jax.ShapeDtypeStruct((npad, cpad), jnp.float32),    # c0 * T0
        ),
        grid_spec=pltpu.PrefetchScalarGridSpec(
            num_scalar_prefetch=0,
            grid=(npad // tm,),
            in_specs=[
                pl.BlockSpec(memory_space=pltpu.MemorySpace.SMEM),  # coef0 (1,)
                pl.BlockSpec((tm, f), lambda i: (i, 0)),
                pl.BlockSpec((f, hpad), lambda i: (0, 0)),
                pl.BlockSpec((1, hpad), lambda i: (0, 0)),
                pl.BlockSpec((hpad, cpad), lambda i: (0, 0)),
                pl.BlockSpec((1, cpad), lambda i: (0, 0)),
            ],
            out_specs=[
                pl.BlockSpec((tm, cpad), lambda i: (i, 0)),
                pl.BlockSpec((tm, cpad), lambda i: (i, 0)),
                pl.BlockSpec((tm, cpad), lambda i: (i, 0)),
            ],
        ),
        compiler_params=pltpu.CompilerParams(
            dimension_semantics=("parallel",),
            vmem_limit_bytes=vmem_limit,
        ),
    )(coef0, x_pad, w1t, b1, w2t, b2)


def _make_cheb_step_kernel(is_first: bool):
    # T_new accumulates directly in its (row-resident) output block; the
    # 2*x - T_prevprev fix-up + bf16 copy + coef accumulate happen at the
    # last contraction step.
    if is_first:
        def kernel(coef_ref, a_ref, txpb_ref, outp_ref,
                   txn_ref, txnb_ref, outn_ref):
            j = pl.program_id(1)

            @pl.when(j == 0)
            def _():
                txn_ref[...] = jnp.zeros_like(txn_ref)

            txn_ref[...] += jnp.dot(a_ref[...], txpb_ref[...],
                                    preferred_element_type=jnp.float32)

            @pl.when(j == pl.num_programs(1) - 1)
            def _():
                t_new = txn_ref[...]                          # T1 = A @ T0
                txnb_ref[...] = t_new.astype(jnp.bfloat16)
                outn_ref[...] = outp_ref[...] + coef_ref[0] * t_new
    else:
        def kernel(coef_ref, a_ref, txpb_ref, txpp_ref, outp_ref,
                   txn_ref, txnb_ref, outn_ref):
            j = pl.program_id(1)

            @pl.when(j == 0)
            def _():
                txn_ref[...] = jnp.zeros_like(txn_ref)

            txn_ref[...] += jnp.dot(a_ref[...], txpb_ref[...],
                                    preferred_element_type=jnp.float32)

            @pl.when(j == pl.num_programs(1) - 1)
            def _():
                t_new = 2.0 * txn_ref[...] - txpp_ref[...]    # 2 A T_{k-1} - T_{k-2}
                txn_ref[...] = t_new
                txnb_ref[...] = t_new.astype(jnp.bfloat16)
                outn_ref[...] = outp_ref[...] + coef_ref[0] * t_new
    return kernel


def cheb_step(coef_k, a_pad, txp_bf16, txpp_f32, out_prev, *,
              tm, tk, is_first, vmem_limit):
    npad, cpad = out_prev.shape
    grid = (npad // tm, npad // tk)

    in_specs = [
        pl.BlockSpec(memory_space=pltpu.MemorySpace.SMEM),      # coef_k (1,)
        # A tile (bf16).  Tunable: pipeline_mode=pl.Buffered(3) -- sweep 2 vs 3
        # on hardware; left at the default double-buffer here.
        pl.BlockSpec((tm, tk), lambda i, j: (i, j)),
        pl.BlockSpec((tk, cpad), lambda i, j: (j, 0)),          # T_prev (bf16)
    ]
    args = [coef_k, a_pad, txp_bf16]
    if not is_first:
        in_specs.append(pl.BlockSpec((tm, cpad), lambda i, j: (i, 0)))  # T_prevprev
        args.append(txpp_f32)
    in_specs.append(pl.BlockSpec((tm, cpad), lambda i, j: (i, 0)))      # out_prev
    args.append(out_prev)

    return pl.pallas_call(
        _make_cheb_step_kernel(is_first),
        out_shape=(
            jax.ShapeDtypeStruct((npad, cpad), jnp.float32),    # T_new (f32)
            jax.ShapeDtypeStruct((npad, cpad), jnp.bfloat16),   # T_new (bf16 carry)
            jax.ShapeDtypeStruct((npad, cpad), jnp.float32),    # out_new
        ),
        grid_spec=pltpu.PrefetchScalarGridSpec(
            num_scalar_prefetch=0,
            grid=grid,
            in_specs=in_specs,
            out_specs=[
                pl.BlockSpec((tm, cpad), lambda i, j: (i, 0)),
                pl.BlockSpec((tm, cpad), lambda i, j: (i, 0)),
                pl.BlockSpec((tm, cpad), lambda i, j: (i, 0)),
            ],
        ),
        compiler_params=pltpu.CompilerParams(
            dimension_semantics=("parallel", "arbitrary"),
            vmem_limit_bytes=vmem_limit,
        ),
    )(*args)


def _forward_stream(params, x_pad, a_pad, plan, K):
    coef = params["coef"]
    vlim = plan["vmem_limit"]
    t0, t0b, out = mlp_forward(coef[0:1], x_pad, params["w1t_pad"],
                               params["b1_pad"], params["w2t_pad"],
                               params["b2_pad"], tm=plan["tm_mlp"],
                               vmem_limit=vlim)
    if K >= 1:
        tx_prev_f, tx_prev_b, tx_prevprev = t0, t0b, t0
        for k in range(1, K + 1):            # K is small & static: unrolled
            t_new, t_new_b, out = cheb_step(
                coef[k:k + 1], a_pad, tx_prev_b, tx_prevprev, out,
                tm=plan["tm"], tk=plan["tk"], is_first=(k == 1),
                vmem_limit=vlim)
            tx_prevprev = tx_prev_f
            tx_prev_f, tx_prev_b = t_new, t_new_b
    return out


# ---------------------------------------------------------------------------
# Glue: parameter init, gcn_norm, full forward
# ---------------------------------------------------------------------------
def init_params(key, num_features, num_hid, num_classes, K,
                hid_lane=128, cls_lane=128):
    k1, k2 = jax.random.split(key, 2)
    # kaiming_normal_ (fan_in, gain sqrt(2)) for linear1.weight [H, F]
    std1 = math.sqrt(2.0 / num_features)
    w1 = std1 * jax.random.normal(k1, (num_hid, num_features), jnp.float32)
    b1 = jnp.zeros((num_hid,), jnp.float32)
    # xavier_normal_ for linear2.weight [C, H]
    std2 = math.sqrt(2.0 / (num_hid + num_classes))
    w2 = std2 * jax.random.normal(k2, (num_classes, num_hid), jnp.float32)
    b2 = jnp.zeros((num_classes,), jnp.float32)

    # ChebGibbsProp: constant cheb_coef init + Jackson-Gibbs damping.
    cheb_coef = jnp.full((K + 1,), 2.0 / (K + 1), jnp.float32)
    damp = [1.0]
    c = math.pi / (K + 2)
    for k in range(1, K + 1):
        damp.append(
            ((K + 2 - k) * math.sin(c) * math.cos(k * c)
             + math.cos(c) * math.sin(k * c)) / ((K + 2) * math.sin(c))
        )
    gibbs_damp = jnp.asarray(damp, jnp.float32)
    coef = cheb_coef * gibbs_damp  # combined per-order coefficient

    # Lane-dense (zero-padded) weights for the kernels: pad H and C to 128.
    hpad = _round_up(max(num_hid, 1), hid_lane)
    cpad = _round_up(max(num_classes, 1), cls_lane)
    w1t_pad = jnp.zeros((num_features, hpad), jnp.float32).at[:, :num_hid].set(w1.T)
    b1_pad = jnp.zeros((1, hpad), jnp.float32).at[:, :num_hid].set(b1)
    w2t_pad = jnp.zeros((hpad, cpad), jnp.float32).at[:num_hid, :num_classes].set(w2.T)
    b2_pad = jnp.zeros((1, cpad), jnp.float32).at[:, :num_classes].set(b2)

    return dict(
        # unpadded (for the pure-JAX references)
        w1t=w1.T, b1=b1, w2t=w2.T, b2=b2,
        # padded / kernel-facing
        w1t_pad=w1t_pad, b1_pad=b1_pad, w2t_pad=w2t_pad, b2_pad=b2_pad,
        coef=coef,
    )


def gcn_norm_dense(edge_index, edge_weight, num_nodes, add_self_loops=False):
    # dense A[dst, src] = w, then D^{-1/2} A D^{-1/2}.
    # Note: no self loops by default (PyG's gcn_norm default adds them).
    src, dst = edge_index[0], edge_index[1]
    a = jnp.zeros((num_nodes, num_nodes), jnp.float32).at[dst, src].add(edge_weight)
    if add_self_loops:
        a = a + jnp.eye(num_nodes, dtype=jnp.float32)
    deg = a.sum(axis=1)
    dinv = jnp.where(deg > 0, 1.0 / jnp.sqrt(deg), 0.0)
    return dinv[:, None] * a * dinv[None, :]


def chebgibbsnet_forward(params, x, a_norm, K, num_classes, *,
                         plan=None, a_pad=None, x_pad=None):
    """Eval-mode forward: dropout layers are identity.

    `plan` / `a_pad` / `x_pad` may be precomputed once (static graph) and
    reused across calls; otherwise they are built here.
    """
    n = x.shape[0]
    if plan is None:
        plan = make_plan(n, x.shape[1], num_classes)
    if a_pad is None:
        a_pad = prepare_adjacency(a_norm, plan)
    if x_pad is None:
        x_pad = prepare_features(x, plan)

    if plan["path"] == "resident":
        out = _forward_resident(params, x_pad, a_pad, plan, K)
    else:
        out = _forward_stream(params, x_pad, a_pad, plan, K)
    return out[:n, :num_classes]


# ---------------------------------------------------------------------------
# Pure-JAX references for sanity checking
# ---------------------------------------------------------------------------
def reference_forward_f32(params, x, a_norm, K):
    h = x @ params["w1t"] + params["b1"]
    h = jnp.where(h > 0, h, NEG_SLOPE * h)
    t0 = h @ params["w2t"] + params["b2"]
    coef = params["coef"]
    out = coef[0] * t0
    if K >= 1:
        tx0 = t0
        tx1 = a_norm @ tx0
        out = out + coef[1] * tx1
        for k in range(2, K + 1):
            tx2 = 2.0 * (a_norm @ tx1) - tx0
            out = out + coef[k] * tx2
            tx0, tx1 = tx1, tx2
    return out


def reference_forward_matched(params, x, a_norm, K):
    # Same mixed precision as the kernels: bf16 A / bf16 T operands, f32 accum.
    h = x @ params["w1t"] + params["b1"]
    h = jnp.where(h > 0, h, NEG_SLOPE * h)
    t0 = (h @ params["w2t"] + params["b2"]).astype(jnp.float32)
    a_bf16 = a_norm.astype(jnp.bfloat16)
    coef = params["coef"]
    out = coef[0] * t0
    if K >= 1:
        tx0 = t0
        tx1 = jnp.dot(a_bf16, tx0.astype(jnp.bfloat16),
                      preferred_element_type=jnp.float32)
        out = out + coef[1] * tx1
        for k in range(2, K + 1):
            tx2 = 2.0 * jnp.dot(a_bf16, tx1.astype(jnp.bfloat16),
                                preferred_element_type=jnp.float32) - tx0
            out = out + coef[k] * tx2
            tx0, tx1 = tx1, tx2
    return out


if __name__ == "__main__":
    N = 16            # nodes
    F_IN = 8          # dataset.num_features
    H = 32            # args.num_hid
    C = 4             # dataset.num_classes
    K = 3             # args.order

    key = jax.random.PRNGKey(0)
    kx, kp = jax.random.split(key, 2)

    # node features
    x = jax.random.normal(kx, (N, F_IN), jnp.float32)

    # deterministic small graph: undirected ring + a few chords
    src = list(range(N)) + [(i + 1) % N for i in range(N)] + [0, 5, 3, 11]
    dst = [(i + 1) % N for i in range(N)] + list(range(N)) + [5, 0, 11, 3]
    edge_index = jnp.asarray([src, dst], jnp.int32)
    edge_weight = jnp.ones((edge_index.shape[1],), jnp.float32)
    a_norm = gcn_norm_dense(edge_index, edge_weight, N)

    params = init_params(kp, F_IN, H, C, K)

    # Path A: fused VMEM-resident kernel (default for a graph this small).
    plan_r = make_plan(N, F_IN, C)
    out_r = chebgibbsnet_forward(params, x, a_norm, K, C, plan=plan_r)
    out_r = jax.block_until_ready(out_r)
    assert out_r.shape == (N, C)
    assert plan_r["path"] == "resident"

    # Path B: streaming kernels, forced (exercises the tiled cheb_step path).
    plan_s = make_plan(N, F_IN, C, force_streaming=True)
    out_s = chebgibbsnet_forward(params, x, a_norm, K, C, plan=plan_s)
    out_s = jax.block_until_ready(out_s)
    assert out_s.shape == (N, C)

    # Precision-matched reference (same bf16 A / f32 accumulation).
    ref_m = reference_forward_matched(params, x, a_norm, K)
    assert jnp.allclose(out_r, ref_m, atol=2e-2, rtol=2e-2), "resident vs matched ref"
    assert jnp.allclose(out_s, ref_m, atol=2e-2, rtol=2e-2), "stream vs matched ref"
    assert jnp.allclose(out_r, out_s, atol=2e-2, rtol=2e-2), "resident vs stream"

    # Full-f32 reference (PyTorch semantics): loose tolerance for bf16 A.
    ref_f = reference_forward_f32(params, x, a_norm, K)
    assert jnp.allclose(out_r, ref_f, atol=1e-1, rtol=1e-1), "mismatch vs f32 ref"

    print("KERNEL_OK")
</pallas_src>

<mosaic_0001>
module attributes {stable_mosaic.version = 11 : i64} {
  func.func @kernel(%arg0: i32, %arg1: memref<4xf32, #tpu.memory_space<smem>>, %arg2: memref<16x8xf32, #tpu.memory_space<vmem>>, %arg3: memref<8x128xf32, #tpu.memory_space<vmem>>, %arg4: memref<1x128xf32, #tpu.memory_space<vmem>>, %arg5: memref<128x128xf32, #tpu.memory_space<vmem>>, %arg6: memref<1x128xf32, #tpu.memory_space<vmem>>, %arg7: memref<16x16xbf16, #tpu.memory_space<vmem>>, %arg8: memref<16x128xf32, #tpu.memory_space<vmem>>, %arg9: memref<16x128xf32, #tpu.memory_space<vmem>>, %arg10: memref<16x128xf32, #tpu.memory_space<vmem>>) attributes {dimension_semantics = [#tpu.dimension_semantics<arbitrary>], iteration_bounds = array<i64: 1>, scalar_prefetch = 0 : i64, scratch_operands = 2 : i64, tpu.core_type = #tpu.core_type<tc>, window_params = [{transform_indices = @transform_0, window_bounds = array<i64: 4>}, {pipeline_mode = #tpu.pipeline_mode<synchronous>, transform_indices = @transform_1, window_bounds = array<i64: 16, 8>}, {pipeline_mode = #tpu.pipeline_mode<synchronous>, transform_indices = @transform_2, window_bounds = array<i64: 8, 128>}, {pipeline_mode = #tpu.pipeline_mode<synchronous>, transform_indices = @transform_3, window_bounds = array<i64: 1, 128>}, {pipeline_mode = #tpu.pipeline_mode<synchronous>, transform_indices = @transform_4, window_bounds = array<i64: 128, 128>}, {pipeline_mode = #tpu.pipeline_mode<synchronous>, transform_indices = @transform_5, window_bounds = array<i64: 1, 128>}, {pipeline_mode = #tpu.pipeline_mode<synchronous>, transform_indices = @transform_6, window_bounds = array<i64: 16, 16>}, {pipeline_mode = #tpu.pipeline_mode<synchronous>, transform_indices = @transform_7, window_bounds = array<i64: 16, 128>}]} {
    %c0 = arith.constant 0 : index
    %c0_0 = arith.constant 0 : index
    %0 = vector.load %arg2[%c0, %c0_0] : memref<16x8xf32, #tpu.memory_space<vmem>>, vector<16x8xf32>
    %c0_1 = arith.constant 0 : index
    %c0_2 = arith.constant 0 : index
    %1 = vector.load %arg3[%c0_1, %c0_2] : memref<8x128xf32, #tpu.memory_space<vmem>>, vector<8x128xf32>
    %cst = arith.constant dense<0.000000e+00> : vector<16x128xf32>
    %2 = tpu.matmul %0, %1, %cst {dimension_numbers = #tpu.dot_dimension_numbers<[1], [0], [0], [1], [0, 0, 1, 1], [], []>} : vector<16x8xf32>, vector<8x128xf32>, vector<16x128xf32> -> vector<16x128xf32>
    %c0_3 = arith.constant 0 : index
    %c0_4 = arith.constant 0 : index
    %3 = vector.load %arg4[%c0_3, %c0_4] : memref<1x128xf32, #tpu.memory_space<vmem>>, vector<1x128xf32>
    %4 = vector.broadcast %3 : vector<1x128xf32> to vector<16x128xf32>
    %5 = arith.addf %2, %4 : vector<16x128xf32>
    %cst_5 = arith.constant 0.000000e+00 : f32
    %6 = vector.broadcast %cst_5 : f32 to vector<16x128xf32>
    %7 = arith.cmpf ogt, %5, %6 : vector<16x128xf32>
    %cst_6 = arith.constant 0.00999999977 : f32
    %8 = vector.broadcast %cst_6 : f32 to vector<16x128xf32>
    %9 = arith.mulf %8, %5 : vector<16x128xf32>
    %10 = arith.select %7, %5, %9 : vector<16x128xi1>, vector<16x128xf32>
    %c0_7 = arith.constant 0 : index
    %c0_8 = arith.constant 0 : index
    %11 = vector.load %arg5[%c0_7, %c0_8] : memref<128x128xf32, #tpu.memory_space<vmem>>, vector<128x128xf32>
    %cst_9 = arith.constant dense<0.000000e+00> : vector<16x128xf32>
    %12 = tpu.matmul %10, %11, %cst_9 {dimension_numbers = #tpu.dot_dimension_numbers<[1], [0], [0], [1], [0, 0, 1, 1], [], []>} : vector<16x128xf32>, vector<128x128xf32>, vector<16x128xf32> -> vector<16x128xf32>
    %c0_10 = arith.constant 0 : index
    %c0_11 = arith.constant 0 : index
    %13 = vector.load %arg6[%c0_10, %c0_11] : memref<1x128xf32, #tpu.memory_space<vmem>>, vector<1x128xf32>
    %14 = vector.broadcast %13 : vector<1x128xf32> to vector<16x128xf32>
    %15 = arith.addf %12, %14 : vector<16x128xf32>
    %c0_12 = arith.constant 0 : index
    %16 = memref.load %arg1[%c0_12] : memref<4xf32, #tpu.memory_space<smem>>
    %17 = vector.broadcast %16 : f32 to vector<16x128xf32>
    %18 = arith.mulf %17, %15 : vector<16x128xf32>
    %c0_13 = arith.constant 0 : index
    %c0_14 = arith.constant 0 : index
    %19 = vector.load %arg8[%c0_13, %c0_14] : memref<16x128xf32, #tpu.memory_space<vmem>>, vector<16x128xf32>
    tpu.vector_store %arg8[%c0_13, %c0_14], %18 {strides = array<i32>} : memref<16x128xf32, #tpu.memory_space<vmem>>, vector<16x128xf32>,
    %c0_15 = arith.constant 0 : index
    %c0_16 = arith.constant 0 : index
    %20 = vector.load %arg9[%c0_15, %c0_16] : memref<16x128xf32, #tpu.memory_space<vmem>>, vector<16x128xf32>
    tpu.vector_store %arg9[%c0_15, %c0_16], %15 {strides = array<i32>} : memref<16x128xf32, #tpu.memory_space<vmem>>, vector<16x128xf32>,
    %c0_17 = arith.constant 0 : index
    %c0_18 = arith.constant 0 : index
    %21 = vector.load %arg7[%c0_17, %c0_18] : memref<16x16xbf16, #tpu.memory_space<vmem>>, vector<16x16xbf16>
    %c0_19 = arith.constant 0 : index
    %c0_20 = arith.constant 0 : index
    %22 = vector.load %arg9[%c0_19, %c0_20] : memref<16x128xf32, #tpu.memory_space<vmem>>, vector<16x128xf32>
    %23 = arith.truncf %22 : vector<16x128xf32> to vector<16x128xbf16>
    %cst_21 = arith.constant dense<0.000000e+00> : vector<16x128xf32>
    %24 = tpu.matmul %21, %23, %cst_21 {dimension_numbers = #tpu.dot_dimension_numbers<[1], [0], [0], [1], [0, 0, 1, 1], [], []>} : vector<16x16xbf16>, vector<16x128xbf16>, vector<16x128xf32> -> vector<16x128xf32>
    %c0_22 = arith.constant 0 : index
    %c0_23 = arith.constant 0 : index
    %25 = vector.load %arg8[%c0_22, %c0_23] : memref<16x128xf32, #tpu.memory_space<vmem>>, vector<16x128xf32>
    %c1 = arith.constant 1 : index
    %26 = memref.load %arg1[%c1] : memref<4xf32, #tpu.memory_space<smem>>
    %27 = vector.broadcast %26 : f32 to vector<16x128xf32>
    %28 = arith.mulf %27, %24 : vector<16x128xf32>
    %29 = arith.addf %25, %28 : vector<16x128xf32>
    %c0_24 = arith.constant 0 : index
    %c0_25 = arith.constant 0 : index
    %30 = vector.load %arg8[%c0_24, %c0_25] : memref<16x128xf32, #tpu.memory_space<vmem>>, vector<16x128xf32>
    tpu.vector_store %arg8[%c0_24, %c0_25], %29 {strides = array<i32>} : memref<16x128xf32, #tpu.memory_space<vmem>>, vector<16x128xf32>,
    %c0_26 = arith.constant 0 : index
    %c0_27 = arith.constant 0 : index
    %31 = vector.load %arg10[%c0_26, %c0_27] : memref<16x128xf32, #tpu.memory_space<vmem>>, vector<16x128xf32>
    tpu.vector_store %arg10[%c0_26, %c0_27], %24 {strides = array<i32>} : memref<16x128xf32, #tpu.memory_space<vmem>>, vector<16x128xf32>,
    %c0_28 = arith.constant 0 : index
    %c0_29 = arith.constant 0 : index
    %32 = vector.load %arg7[%c0_28, %c0_29] : memref<16x16xbf16, #tpu.memory_space<vmem>>, vector<16x16xbf16>
    %c0_30 = arith.constant 0 : index
    %c0_31 = arith.constant 0 : index
    %33 = vector.load %arg10[%c0_30, %c0_31] : memref<16x128xf32, #tpu.memory_space<vmem>>, vector<16x128xf32>
    %34 = arith.truncf %33 : vector<16x128xf32> to vector<16x128xbf16>
    %cst_32 = arith.constant dense<0.000000e+00> : vector<16x128xf32>
    %35 = tpu.matmul %32, %34, %cst_32 {dimension_numbers = #tpu.dot_dimension_numbers<[1], [0], [0], [1], [0, 0, 1, 1], [], []>} : vector<16x16xbf16>, vector<16x128xbf16>, vector<16x128xf32> -> vector<16x128xf32>
    %cst_33 = arith.constant 2.000000e+00 : f32
    %36 = vector.broadcast %cst_33 : f32 to vector<16x128xf32>
    %37 = arith.mulf %36, %35 : vector<16x128xf32>
    %c0_34 = arith.constant 0 : index
    %c0_35 = arith.constant 0 : index
    %38 = vector.load %arg9[%c0_34, %c0_35] : memref<16x128xf32, #tpu.memory_space<vmem>>, vector<16x128xf32>
    %39 = arith.subf %37, %38 : vector<16x128xf32>
    %c0_36 = arith.constant 0 : index
    %c0_37 = arith.constant 0 : index
    %40 = vector.load %arg8[%c0_36, %c0_37] : memref<16x128xf32, #tpu.memory_space<vmem>>, vector<16x128xf32>
    %c2 = arith.constant 2 : index
    %41 = memref.load %arg1[%c2] : memref<4xf32, #tpu.memory_space<smem>>
    %42 = vector.broadcast %41 : f32 to vector<16x128xf32>
    %43 = arith.mulf %42, %39 : vector<16x128xf32>
    %44 = arith.addf %40, %43 : vector<16x128xf32>
    %c0_38 = arith.constant 0 : index
    %c0_39 = arith.constant 0 : index
    %45 = vector.load %arg8[%c0_38, %c0_39] : memref<16x128xf32, #tpu.memory_space<vmem>>, vector<16x128xf32>
    tpu.vector_store %arg8[%c0_38, %c0_39], %44 {strides = array<i32>} : memref<16x128xf32, #tpu.memory_space<vmem>>, vector<16x128xf32>,
    %c0_40 = arith.constant 0 : index
    %c0_41 = arith.constant 0 : index
    %46 = vector.load %arg9[%c0_40, %c0_41] : memref<16x128xf32, #tpu.memory_space<vmem>>, vector<16x128xf32>
    tpu.vector_store %arg9[%c0_40, %c0_41], %39 {strides = array<i32>} : memref<16x128xf32, #tpu.memory_space<vmem>>, vector<16x128xf32>,
    %c0_42 = arith.constant 0 : index
    %c0_43 = arith.constant 0 : index
    %47 = vector.load %arg7[%c0_42, %c0_43] : memref<16x16xbf16, #tpu.memory_space<vmem>>, vector<16x16xbf16>
    %c0_44 = arith.constant 0 : index
    %c0_45 = arith.constant 0 : index
    %48 = vector.load %arg9[%c0_44, %c0_45] : memref<16x128xf32, #tpu.memory_space<vmem>>, vector<16x128xf32>
    %49 = arith.truncf %48 : vector<16x128xf32> to vector<16x128xbf16>
    %cst_46 = arith.constant dense<0.000000e+00> : vector<16x128xf32>
    %50 = tpu.matmul %47, %49, %cst_46 {dimension_numbers = #tpu.dot_dimension_numbers<[1], [0], [0], [1], [0, 0, 1, 1], [], []>} : vector<16x16xbf16>, vector<16x128xbf16>, vector<16x128xf32> -> vector<16x128xf32>
    %cst_47 = arith.constant 2.000000e+00 : f32
    %51 = vector.broadcast %cst_47 : f32 to vector<16x128xf32>
    %52 = arith.mulf %51, %50 : vector<16x128xf32>
    %c0_48 = arith.constant 0 : index
    %c0_49 = arith.constant 0 : index
    %53 = vector.load %arg10[%c0_48, %c0_49] : memref<16x128xf32, #tpu.memory_space<vmem>>, vector<16x128xf32>
    %54 = arith.subf %52, %53 : vector<16x128xf32>
    %c0_50 = arith.constant 0 : index
    %c0_51 = arith.constant 0 : index
    %55 = vector.load %arg8[%c0_50, %c0_51] : memref<16x128xf32, #tpu.memory_space<vmem>>, vector<16x128xf32>
    %c3 = arith.constant 3 : index
    %56 = memref.load %arg1[%c3] : memref<4xf32, #tpu.memory_space<smem>>
    %57 = vector.broadcast %56 : f32 to vector<16x128xf32>
    %58 = arith.mulf %57, %54 : vector<16x128xf32>
    %59 = arith.addf %55, %58 : vector<16x128xf32>
    %c0_52 = arith.constant 0 : index
    %c0_53 = arith.constant 0 : index
    %60 = vector.load %arg8[%c0_52, %c0_53] : memref<16x128xf32, #tpu.memory_space<vmem>>, vector<16x128xf32>
    tpu.vector_store %arg8[%c0_52, %c0_53], %59 {strides = array<i32>} : memref<16x128xf32, #tpu.memory_space<vmem>>, vector<16x128xf32>,
    %c0_54 = arith.constant 0 : index
    %c0_55 = arith.constant 0 : index
    %61 = vector.load %arg10[%c0_54, %c0_55] : memref<16x128xf32, #tpu.memory_space<vmem>>, vector<16x128xf32>
    tpu.vector_store %arg10[%c0_54, %c0_55], %54 {strides = array<i32>} : memref<16x128xf32, #tpu.memory_space<vmem>>, vector<16x128xf32>,
    return
  }
  func.func @transform_0(%arg0: i32) -> i32 {
    %c0_i32 = arith.constant 0 : i32
    %c0_i32_0 = arith.constant 0 : i32
    return %c0_i32 : i32
  }
  func.func @transform_1(%arg0: i32) -> (i32, i32) {
    %c0_i32 = arith.constant 0 : i32
    %c0_i32_0 = arith.constant 0 : i32
    %c0_i32_1 = arith.constant 0 : i32
    return %c0_i32, %c0_i32_0 : i32, i32
  }
  func.func @transform_2(%arg0: i32) -> (i32, i32) {
    %c0_i32 = arith.constant 0 : i32
    %c0_i32_0 = arith.constant 0 : i32
    %c0_i32_1 = arith.constant 0 : i32
    return %c0_i32, %c0_i32_0 : i32, i32
  }
  func.func @transform_3(%arg0: i32) -> (i32, i32) {
    %c0_i32 = arith.constant 0 : i32
    %c0_i32_0 = arith.constant 0 : i32
    %c0_i32_1 = arith.constant 0 : i32
    return %c0_i32, %c0_i32_0 : i32, i32
  }
  func.func @transform_4(%arg0: i32) -> (i32, i32) {
    %c0_i32 = arith.constant 0 : i32
    %c0_i32_0 = arith.constant 0 : i32
    %c0_i32_1 = arith.constant 0 : i32
    return %c0_i32, %c0_i32_0 : i32, i32
  }
  func.func @transform_5(%arg0: i32) -> (i32, i32) {
    %c0_i32 = arith.constant 0 : i32
    %c0_i32_0 = arith.constant 0 : i32
    %c0_i32_1 = arith.constant 0 : i32
    return %c0_i32, %c0_i32_0 : i32, i32
  }
  func.func @transform_6(%arg0: i32) -> (i32, i32) {
    %c0_i32 = arith.constant 0 : i32
    %c0_i32_0 = arith.constant 0 : i32
    %c0_i32_1 = arith.constant 0 : i32
    return %c0_i32, %c0_i32_0 : i32, i32
  }
  func.func @transform_7(%arg0: i32) -> (i32, i32) {
    %c0_i32 = arith.constant 0 : i32
    %c0_i32_0 = arith.constant 0 : i32
    %c0_i32_1 = arith.constant 0 : i32
    return %c0_i32, %c0_i32_0 : i32, i32
  }
}

</mosaic_0001>

<llo_original>
// kernel: tpu_custom_call.1
$region0: #{tpu_custom_call.1}
  #allocation0 [shape = 'u32[]', space=smem, size = 0x4, offset = 0x4, fixed_abs, tag = 'smem constant byte address 0x4 - core index']
  #allocation1 [shape = 'u32[72,128]{1,0:T(1,128)}', space=vmem, size = 0x9000, scoped, tag = 'internal scratch']
  #allocation2 [shape = 'f32[16,128]{1,0:T(8,128)}', space=vmem, size = 0x2000, scoped, tag = 'scratch operand']
  #allocation3 [shape = 'f32[16,128]{1,0:T(8,128)}', space=vmem, size = 0x2000, scoped, tag = 'scratch operand']
  %s0 = inlined_call_operand.vmem [shape: f32[4], index: 0, kind: input, shape index: {}]
  %s1 = inlined_call_operand.vmem [shape: f32[16,8], index: 1, kind: input, shape index: {}]
  %s2 = inlined_call_operand.vmem [shape: f32[8,128], index: 2, kind: input, shape index: {}]
  %s3 = inlined_call_operand.vmem [shape: f32[1,128], index: 3, kind: input, shape index: {}]
  %s4 = inlined_call_operand.hbm [shape: f32[128,128], index: 4, kind: input, shape index: {}]
  %s5 = inlined_call_operand.vmem [shape: f32[1,128], index: 5, kind: input, shape index: {}]
  %s6 = inlined_call_operand.vmem [shape: bf16[16,16], index: 6, kind: input, shape index: {}]
  %s7 = inlined_call_operand.hbm [shape: f32[16,128], index: 7, kind: output, shape index: {}]
  %s8 = sld [smem:[#allocation0]]
  $region46: #{tpu_custom_call.1} parent=0
    _
  %s10 = ssub.s32 1, %s8
  %s11 = scalar_select 0, %s10, %s8
  $region1: #{tpu_custom_call.1} parent=0
    #allocation4 [shape = 'u8[512]{0}', space=smem, size = 0x200, scoped, tag = 'input window, operand 0, single buffered']
    #allocation5 [shape = 's32[1]{0}', space=sflag, size = 0x4, scoped, tag = 'scoped memory for tpu_custom_call.1']
    #allocation6 [shape = 's32[1]{0}', space=sflag, size = 0x4, scoped, tag = 'scoped memory for tpu_custom_call.1']
    #allocation7 [shape = 's32[1]{0}', space=sflag, size = 0x4, scoped, tag = 'scoped memory for tpu_custom_call.1']
    #allocation8 [shape = 'u8[65536]{0}', space=vmem, size = 0x10000, scoped, tag = 'input window, operand 4, single buffered']
    #allocation9 [shape = 'u8[8192]{0}', space=vmem, size = 0x2000, scoped, tag = 'output window, operand 0, single buffered']
    %12 = vsyncpa [#allocation7], 0
    %13 = vsyncpa [#allocation5], 0
    %14 = vsyncpa [#allocation6], 0
    // Predicated region
    $region2: #{tpu_custom_call.1} parent=1 // pred_check
      _
    $region3: #{tpu_custom_call.1} parent=1 // pred_check_branch
      %16 = sbr.rel (0) target = $region5
    $region4: #{tpu_custom_call.1} parent=1 // pred_region
      %18 = vsyncadd [#allocation7], 0
      %s20 = sshll.u32 %s0, 4
      %s21 = int_to_ptr.vmem [resolvable:$true] %s20
      %23 = dma.vmem_to_smem %s21, 16, [#allocation4], [#allocation7]
    $region5: #{tpu_custom_call.1} parent=1 // pred_fallthru
      _
    // Predicated region
    $region6: #{tpu_custom_call.1} parent=1 // pred_check
      _
    $region7: #{tpu_custom_call.1} parent=1 // pred_check_branch
      %25 = sbr.rel (0) target = $region9
    $region8: #{tpu_custom_call.1} parent=1 // pred_region
      _
    $region9: #{tpu_custom_call.1} parent=1 // pred_fallthru
      _
    // Predicated region
    $region10: #{tpu_custom_call.1} parent=1 // pred_check
      _
    $region11: #{tpu_custom_call.1} parent=1 // pred_check_branch
      %27 = sbr.rel (0) target = $region13
    $region12: #{tpu_custom_call.1} parent=1 // pred_region
      _
    $region13: #{tpu_custom_call.1} parent=1 // pred_fallthru
      _
    // Predicated region
    $region14: #{tpu_custom_call.1} parent=1 // pred_check
      _
    $region15: #{tpu_custom_call.1} parent=1 // pred_check_branch
      %29 = sbr.rel (0) target = $region17
    $region16: #{tpu_custom_call.1} parent=1 // pred_region
      _
    $region17: #{tpu_custom_call.1} parent=1 // pred_fallthru
      _
    // Predicated region
    $region18: #{tpu_custom_call.1} parent=1 // pred_check
      _
    $region19: #{tpu_custom_call.1} parent=1 // pred_check_branch
      %31 = sbr.rel (0) target = $region21
    $region20: #{tpu_custom_call.1} parent=1 // pred_region
      %33 = vsyncadd [#allocation5], 0
      %s34 = sshll.u32 %s4, 4
      %s35 = int_to_ptr.hbm [resolvable:$true] %s34
      %s36 = sshll.u32 [#allocation8], 4
      %s37 = int_to_ptr.vmem [resolvable:$true] %s36
      %42 = dma.hbm_to_vmem [thread:$0]  %s35, 2048, %s37, [#allocation5], 128, 128, 8
    $region21: #{tpu_custom_call.1} parent=1 // pred_fallthru
      _
    // Predicated region
    $region22: #{tpu_custom_call.1} parent=1 // pred_check
      _
    $region23: #{tpu_custom_call.1} parent=1 // pred_check_branch
      %44 = sbr.rel (0) target = $region25
    $region24: #{tpu_custom_call.1} parent=1 // pred_region
      _
    $region25: #{tpu_custom_call.1} parent=1 // pred_fallthru
      _
    // Predicated region
    $region26: #{tpu_custom_call.1} parent=1 // pred_check
      _
    $region27: #{tpu_custom_call.1} parent=1 // pred_check_branch
      %46 = sbr.rel (0) target = $region29
    $region28: #{tpu_custom_call.1} parent=1 // pred_region
      _
    $region29: #{tpu_custom_call.1} parent=1 // pred_fallthru
      _
    // Predicated region
    $region30: #{tpu_custom_call.1} parent=1 // pred_check
      _
    $region31: #{tpu_custom_call.1} parent=1 // pred_check_branch
      %48 = sbr.rel (0) target = $region33
    $region32: #{tpu_custom_call.1} parent=1 // pred_region
      %50 = dma.done [#allocation7], 16
    $region33: #{tpu_custom_call.1} parent=1 // pred_fallthru
      _
    // Predicated region
    $region34: #{tpu_custom_call.1} parent=1 // pred_check
      _
    $region35: #{tpu_custom_call.1} parent=1 // pred_check_branch
      %52 = sbr.rel (0) target = $region37
    $region36: #{tpu_custom_call.1} parent=1 // pred_region
      %54 = dma.done [#allocation5], 2048
    $region37: #{tpu_custom_call.1} parent=1 // pred_fallthru
      _
    %55 = sfence
    %v57 = vld [vmem:[%s1] sm:$0xff]
    %v58 = vld [vmem:[%s1 + $0x8] sm:$0xff]
    %v59 = vld [vmem:[%s2] sm:$0xff]
    %v60 = vld [vmem:[%s3] sm:$0x1]
    %v62 = vperm.slane %v60, 0
    %vm64 = vcmask 64512
    %v66 = vsel %vm64, %v57, 0
    %v69 = vsel %vm64, %v58, 0
    %71 = vmatpush.msra.mxu0 0.0
    %72 = vmatpush.msra.mxu0 0.0
    %73 = vmatpush.msra.mxu0 0.0
    %74 = vmatpush.msra.mxu0 0.0
    %75 = vmatpush.msra.mxu0 0.0
    %76 = vmatpush.msra.mxu0 0.0
    %77 = vmatpush.msra.mxu0 0.0
    %78 = vmatpush.msra.mxu0 0.0
    %79 = vmatpush.msra.mxu0 0.0
    %80 = vmatpush.msra.mxu0 0.0
    %81 = vmatpush.msra.mxu0 0.0
    %82 = vmatpush.msra.mxu0 0.0
    %83 = vmatpush.msra.mxu0 0.0
    %84 = vmatpush.msra.mxu0 0.0
    %85 = vmatpush.msra.mxu0 0.0
    %86 = vmatpush.msra.mxu0 %v59
    %87 = vmatmul.f32.gmra.mxu0 %v66
    %v88 = vpop.f32.mrf.mxu0
    %v89 = vadd.f32 %v62, %v88
    %90 = vmatmul.f32.gmra.mxu0 %v69
    %v91 = vpop.f32.mrf.mxu0
    %v92 = vadd.f32 %v62, %v91
    %93 = vdwg.mxu0
    %vm94 = vcmp.gt.f32.partialorder %v89, 0.0
    %vm95 = vcmp.gt.f32.partialorder %v92, 0.0
    %v96 = vmul.f32 %v89, 0.01
    %v97 = vmul.f32 %v92, 0.01
    %v98 = vsel %vm94, %v89, %v96
    %v99 = vsel %vm95, %v92, %v97
    %v100 = vld [vmem:[#allocation8] sm:$0xff]
    %v101 = vld [vmem:[#allocation8 + $0x8] sm:$0xff]
    %v102 = vld [vmem:[#allocation8 + $0x10] sm:$0xff]
    %v103 = vld [vmem:[#allocation8 + $0x18] sm:$0xff]
    %v104 = vld [vmem:[#allocation8 + $0x20] sm:$0xff]
    %v105 = vld [vmem:[#allocation8 + $0x28] sm:$0xff]
    %v106 = vld [vmem:[#allocation8 + $0x30] sm:$0xff]
    %v107 = vld [vmem:[#allocation8 + $0x38] sm:$0xff]
    %v108 = vld [vmem:[#allocation8 + $0x40] sm:$0xff]
    %v109 = vld [vmem:[#allocation8 + $0x48] sm:$0xff]
    %v110 = vld [vmem:[#allocation8 + $0x50] sm:$0xff]
    %v111 = vld [vmem:[#allocation8 + $0x58] sm:$0xff]
    %v112 = vld [vmem:[#allocation8 + $0x60] sm:$0xff]
    %v113 = vld [vmem:[#allocation8 + $0x68] sm:$0xff]
    %v114 = vld [vmem:[#allocation8 + $0x70] sm:$0xff]
    %v115 = vld [vmem:[#allocation8 + $0x78] sm:$0xff]
    %v116 = vld [vmem:[%s5] sm:$0x1]
    %v118 = vperm.slane %v116, 0
    %120 = vmatpush.msra.mxu0 %v115
    %121 = vmatpush.msra.mxu0 %v114
    %122 = vmatpush.msra.mxu0 %v113
    %123 = vmatpush.msra.mxu0 %v112
    %124 = vmatpush.msra.mxu0 %v111
    %125 = vmatpush.msra.mxu0 %v110
    %126 = vmatpush.msra.mxu0 %v109
    %127 = vmatpush.msra.mxu0 %v108
    %128 = vmatpush.msra.mxu0 %v107
    %129 = vmatpush.msra.mxu0 %v106
    %130 = vmatpush.msra.mxu0 %v105
    %131 = vmatpush.msra.mxu0 %v104
    %132 = vmatpush.msra.mxu0 %v103
    %133 = vmatpush.msra.mxu0 %v102
    %134 = vmatpush.msra.mxu0 %v101
    %135 = vmatpush.msra.mxu0 %v100
    %136 = vmatmul.f32.gmra.mxu0 %v98
    %v137 = vpop.f32.mrf.mxu0
    %v138 = vadd.f32 %v118, %v137
    %139 = vmatmul.f32.gmra.mxu0 %v99
    %v140 = vpop.f32.mrf.mxu0
    %v141 = vadd.f32 %v118, %v140
    %142 = vdwg.mxu0
    %s143 = sld [smem:[#allocation4]]
    %v144 = vstv %s143
    %v145 = vmul.f32 %v144, %v138
    %v146 = vmul.f32 %v144, %v141
    %147 = vst [vmem:[#allocation9] sm:$0xff] %v145
    %148 = vst [vmem:[#allocation9 + $0x8] sm:$0xff] %v146
    %149 = vst [vmem:[#allocation2] sm:$0xff] %v138
    %150 = vst [vmem:[#allocation2 + $0x8] sm:$0xff] %v141
    %v151 = vld [vmem:[%s6] sm:$0xf]
    %v152 = vld [vmem:[%s6 + $0x4] sm:$0xf]
    %v153 = vld [vmem:[#allocation2] sm:$0xff]
    %v154 = vld [vmem:[#allocation2 + $0x8] sm:$0xff]
    %v155 = vpack.c.bf16 %v154, %v153
    %v158 = vunpack.c.l.b16 %v151
    %v159 = vunpack.c.l.b16 %v152
    %v160 = vpack.c.b16 %v159, %v158
    %vm161 = vcmask 130048
    %v163 = vsel %vm161, %v160, 0
    %165 = vmatpush.bf16.msra.mxu0 0
    %166 = vmatpush.bf16.msra.mxu0 0
    %167 = vmatpush.bf16.msra.mxu0 0
    %168 = vmatpush.bf16.msra.mxu0 0
    %169 = vmatpush.bf16.msra.mxu0 0
    %170 = vmatpush.bf16.msra.mxu0 0
    %171 = vmatpush.bf16.msra.mxu0 0
    %172 = vmatpush.bf16.msra.mxu0 %v155
    %173 = vmatmul.bf16.gmra.mxu0 %v163
    %v174 = vpop.f32.mrf.mxu0
    %v175 = vadd.f32 0.0, %v174
    %v176 = vpop.f32.mrf.mxu0
    %v177 = vadd.f32 0.0, %v176
    %178 = vdwg.mxu0
    %v179 = vld [vmem:[#allocation9] sm:$0xff]
    %v180 = vld [vmem:[#allocation9 + $0x8] sm:$0xff]
    %s181 = sld [smem:[#allocation4 + $0x1]]
    %v182 = vstv %s181
    %v183 = vmul.f32 %v182, %v175
    %v184 = vmul.f32 %v182, %v177
    %v185 = vadd.f32 %v179, %v183
    %v186 = vadd.f32 %v180, %v184
    %187 = vst [vmem:[#allocation9] sm:$0xff] %v185
    %188 = vst [vmem:[#allocation9 + $0x8] sm:$0xff] %v186
    %189 = vst [vmem:[#allocation3] sm:$0xff] %v175
    %190 = vst [vmem:[#allocation3 + $0x8] sm:$0xff] %v177
    %v191 = vld [vmem:[%s6] sm:$0xf]
    %v192 = vld [vmem:[%s6 + $0x4] sm:$0xf]
    %v193 = vld [vmem:[#allocation3] sm:$0xff]
    %v194 = vld [vmem:[#allocation3 + $0x8] sm:$0xff]
    %v195 = vpack.c.bf16 %v194, %v193
    %v198 = vunpack.c.l.b16 %v191
    %v199 = vunpack.c.l.b16 %v192
    %v200 = vpack.c.b16 %v199, %v198
    %v202 = vsel %vm161, %v200, 0
    %204 = vmatpush.bf16.msra.mxu0 0
    %205 = vmatpush.bf16.msra.mxu0 0
    %206 = vmatpush.bf16.msra.mxu0 0
    %207 = vmatpush.bf16.msra.mxu0 0
    %208 = vmatpush.bf16.msra.mxu0 0
    %209 = vmatpush.bf16.msra.mxu0 0
    %210 = vmatpush.bf16.msra.mxu0 0
    %211 = vmatpush.bf16.msra.mxu0 %v195
    %212 = vmatmul.bf16.gmra.mxu0 %v202
    %v213 = vpop.f32.mrf.mxu0
    %v214 = vadd.f32 0.0, %v213
    %v215 = vpop.f32.mrf.mxu0
    %v216 = vadd.f32 0.0, %v215
    %217 = vdwg.mxu0
    %v218 = vmul.f32 %v214, 2.0
    %v219 = vmul.f32 %v216, 2.0
    %v220 = vld [vmem:[#allocation2] sm:$0xff]
    %v221 = vld [vmem:[#allocation2 + $0x8] sm:$0xff]
    %v222 = vsub.f32 %v218, %v220
    %v223 = vsub.f32 %v219, %v221
    %v224 = vld [vmem:[#allocation9] sm:$0xff]
    %v225 = vld [vmem:[#allocation9 + $0x8] sm:$0xff]
    %s226 = sld [smem:[#allocation4 + $0x2]]
    %v227 = vstv %s226
    %v228 = vmul.f32 %v227, %v222
    %v229 = vmul.f32 %v227, %v223
    %v230 = vadd.f32 %v224, %v228
    %v231 = vadd.f32 %v225, %v229
    %232 = vst [vmem:[#allocation9] sm:$0xff] %v230
    %233 = vst [vmem:[#allocation9 + $0x8] sm:$0xff] %v231
    %234 = vst [vmem:[#allocation2] sm:$0xff] %v222
    %235 = vst [vmem:[#allocation2 + $0x8] sm:$0xff] %v223
    %v236 = vld [vmem:[%s6] sm:$0xf]
    %v237 = vld [vmem:[%s6 + $0x4] sm:$0xf]
    %v238 = vld [vmem:[#allocation2] sm:$0xff]
    %v239 = vld [vmem:[#allocation2 + $0x8] sm:$0xff]
    %v240 = vpack.c.bf16 %v239, %v238
    %v243 = vunpack.c.l.b16 %v236
    %v244 = vunpack.c.l.b16 %v237
    %v245 = vpack.c.b16 %v244, %v243
    %v247 = vsel %vm161, %v245, 0
    %249 = vmatpush.bf16.msra.mxu0 0
    %250 = vmatpush.bf16.msra.mxu0 0
    %251 = vmatpush.bf16.msra.mxu0 0
    %252 = vmatpush.bf16.msra.mxu0 0
    %253 = vmatpush.bf16.msra.mxu0 0
    %254 = vmatpush.bf16.msra.mxu0 0
    %255 = vmatpush.bf16.msra.mxu0 0
    %256 = vmatpush.bf16.msra.mxu0 %v240
    %257 = vmatmul.bf16.gmra.mxu0 %v247
    %v258 = vpop.f32.mrf.mxu0
    %v259 = vadd.f32 0.0, %v258
    %v260 = vpop.f32.mrf.mxu0
    %v261 = vadd.f32 0.0, %v260
    %262 = vdwg.mxu0
    %v263 = vmul.f32 %v259, 2.0
    %v264 = vmul.f32 %v261, 2.0
    %v265 = vld [vmem:[#allocation3] sm:$0xff]
    %v266 = vld [vmem:[#allocation3 + $0x8] sm:$0xff]
    %v267 = vsub.f32 %v263, %v265
    %v268 = vsub.f32 %v264, %v266
    %v269 = vld [vmem:[#allocation9] sm:$0xff]
    %v270 = vld [vmem:[#allocation9 + $0x8] sm:$0xff]
    %s271 = sld [smem:[#allocation4 + $0x3]]
    %v272 = vstv %s271
    %v273 = vmul.f32 %v272, %v267
    %v274 = vmul.f32 %v272, %v268
    %v275 = vadd.f32 %v269, %v273
    %v276 = vadd.f32 %v270, %v274
    %277 = vst [vmem:[#allocation9] sm:$0xff] %v275
    %278 = vst [vmem:[#allocation9 + $0x8] sm:$0xff] %v276
    %279 = vst [vmem:[#allocation3] sm:$0xff] %v267
    %280 = vst [vmem:[#allocation3 + $0x8] sm:$0xff] %v268
    // Predicated region
    $region38: #{tpu_custom_call.1} parent=1 // pred_check
      _
    $region39: #{tpu_custom_call.1} parent=1 // pred_check_branch
      %282 = sbr.rel (0) target = $region41
    $region40: #{tpu_custom_call.1} parent=1 // pred_region
      %284 = vsyncadd [#allocation6], 0
      %s285 = sshll.u32 [#allocation9], 4
      %s286 = int_to_ptr.vmem [resolvable:$true] %s285
      %s287 = sshll.u32 %s7, 4
      %s288 = int_to_ptr.hbm [resolvable:$true] %s287
      %293 = dma.vmem_to_hbm [thread:$0]  %s286, 256, %s288, [#allocation6], 128, 128, 8
    $region41: #{tpu_custom_call.1} parent=1 // pred_fallthru
      _
    // Predicated region
    $region42: #{tpu_custom_call.1} parent=1 // pred_check
      _
    $region43: #{tpu_custom_call.1} parent=1 // pred_check_branch
      %295 = sbr.rel (0) target = $region45
    $region44: #{tpu_custom_call.1} parent=1 // pred_region
      %297 = dma.done [#allocation6], 256
    $region45: #{tpu_custom_call.1} parent=1 // pred_fallthru
      _
    %298 = vsyncpa [#allocation5], 1
    %299 = vsyncpa [#allocation6], 1
    %300 = vsyncpa [#allocation7], 1

</llo_original>
